<compile_context>
chip_gen: v5e
topology: v5e:2x2
jax: 0.10.0
libtpu: 0.0.40
codegen_flags: <defaults>
</compile_context>

<pallas_src>
import jax
import jax.numpy as jnp
from jax.experimental import pallas as pl
from jax.experimental.pallas import tpu as pltpu

_LANE = 128
_SUBLANE = 8


def _head_kernel(x_ref, w1_ref, b1_ref, w2_ref, b2_ref, o_ref):
    # x_ref: (TB, in_dim)   w1_ref: (in_dim, 128)  b1_ref: (1, 128)
    # w2_ref: (128, C_pad)  b2_ref: (1, C_pad)     o_ref: (TB, C_pad)
    x = x_ref[...]
    h = jnp.dot(x, w1_ref[...], preferred_element_type=jnp.float32) + b1_ref[...]
    # sigmoid(x) == 0.5 * (tanh(x/2) + 1): single EUP op, no VPU divide.
    h = 0.5 * (jnp.tanh(0.5 * h) + 1.0)
    out = jnp.dot(h, w2_ref[...], preferred_element_type=jnp.float32) + b2_ref[...]
    o_ref[...] = out.astype(o_ref.dtype)


def _round_up(x, m):
    return (x + m - 1) // m * m


def tfc_prediction_head(emb, w1, b1, w2, b2, *, block_b=1024):
    """emb: (B, conexoes, 128) float32.
    w1: (conexoes*128, 64), b1: (64,), w2: (64, num_classes), b2: (num_classes,)
    (weights stored as (in, out) == PyTorch weight.T).
    Returns (B, num_classes) float32."""
    B = emb.shape[0]
    x = emb.reshape(B, -1).astype(jnp.float32)        # flatten in plain JAX (glue)
    in_dim = x.shape[1]                                # 256 (lane-aligned)
    hid = w1.shape[1]                                  # 64
    num_classes = w2.shape[1]

    hid_p = _round_up(hid, _LANE)                      # 128
    c_p = _round_up(num_classes, _LANE)                # 128

    # Zero-pad hidden and class dims so both matmuls and the output store are
    # full-lane.  Padded hidden columns produce sigmoid(0)=0.5 but the
    # corresponding w2 rows are zero, so they contribute nothing; padded class
    # columns give 0 logits and are sliced off below.
    w1_p = jnp.zeros((in_dim, hid_p), jnp.float32).at[:, :hid].set(w1)
    b1_p = jnp.zeros((1, hid_p), jnp.float32).at[:, :hid].set(b1.reshape(1, hid))
    w2_p = jnp.zeros((hid_p, c_p), jnp.float32).at[:hid, :num_classes].set(w2)
    b2_p = jnp.zeros((1, c_p), jnp.float32).at[:, :num_classes].set(
        b2.reshape(1, num_classes))

    # Batch tiling: TB rows per grid step (sublane-aligned); batch padded to a
    # multiple of TB with zero rows (garbage rows sliced off at the end).
    tb = min(block_b, _round_up(B, _SUBLANE))
    b_pad = _round_up(B, tb)
    if b_pad != B:
        x = jnp.pad(x, ((0, b_pad - B), (0, 0)))

    grid = (b_pad // tb,)

    flops = 2 * b_pad * (in_dim * hid_p + hid_p * c_p)
    bytes_accessed = 4 * (b_pad * (in_dim + c_p)
                          + in_dim * hid_p + hid_p
                          + hid_p * c_p + c_p)

    out = pl.pallas_call(
        _head_kernel,
        out_shape=jax.ShapeDtypeStruct((b_pad, c_p), jnp.float32),
        grid_spec=pl.GridSpec(
            grid=grid,
            in_specs=[
                pl.BlockSpec((tb, in_dim), lambda i: (i, 0)),      # batch-tiled x
                pl.BlockSpec((in_dim, hid_p), lambda i: (0, 0)),   # resident weights
                pl.BlockSpec((1, hid_p), lambda i: (0, 0)),
                pl.BlockSpec((hid_p, c_p), lambda i: (0, 0)),
                pl.BlockSpec((1, c_p), lambda i: (0, 0)),
            ],
            out_specs=pl.BlockSpec((tb, c_p), lambda i: (i, 0)),
        ),
        compiler_params=pltpu.CompilerParams(
            dimension_semantics=("parallel",)),
        cost_estimate=pl.CostEstimate(
            flops=flops,
            transcendentals=b_pad * hid_p,
            bytes_accessed=bytes_accessed),
    )(x, w1_p, b1_p, w2_p, b2_p)

    return out[:B, :num_classes]


if __name__ == "__main__":
    CONEXOES = 2
    FEAT = 128
    NUM_CLASSES = 10
    IN_DIM = CONEXOES * FEAT   # 256
    HID = 64

    key = jax.random.PRNGKey(0)
    k_emb, k_w1, k_b1, k_w2, k_b2, k_emb2 = jax.random.split(key, 6)

    # Deterministic parameter init; stored as (in, out) == PyTorch weight.T.
    w1 = jax.random.normal(k_w1, (IN_DIM, HID), dtype=jnp.float32) * 0.05
    b1 = jax.random.normal(k_b1, (HID,), dtype=jnp.float32) * 0.05
    w2 = jax.random.normal(k_w2, (HID, NUM_CLASSES), dtype=jnp.float32) * 0.05
    b2 = jax.random.normal(k_b2, (NUM_CLASSES,), dtype=jnp.float32) * 0.05

    def ref_fn(e):
        return jax.nn.sigmoid(e.reshape(e.shape[0], -1) @ w1 + b1) @ w2 + b2

    # Small batch (matches the module's toy usage).
    B = 8
    emb = jax.random.normal(k_emb, (B, CONEXOES, FEAT), dtype=jnp.float32)
    out = jax.block_until_ready(tfc_prediction_head(emb, w1, b1, w2, b2))
    assert out.shape == (B, NUM_CLASSES)
    assert jnp.allclose(out, ref_fn(emb), atol=1e-5, rtol=1e-5)

    # Larger, non-aligned batch: exercises batch padding + multi-step grid.
    B2 = 300
    emb2 = jax.random.normal(k_emb2, (B2, CONEXOES, FEAT), dtype=jnp.float32)
    out2 = jax.block_until_ready(
        tfc_prediction_head(emb2, w1, b1, w2, b2, block_b=128))
    assert out2.shape == (B2, NUM_CLASSES)
    assert jnp.allclose(out2, ref_fn(emb2), atol=1e-5, rtol=1e-5)

    print("KERNEL_OK")
</pallas_src>

<mosaic_0001>
module attributes {stable_mosaic.version = 11 : i64} {
  func.func @_head_kernel(%arg0: i32, %arg1: memref<8x256xf32, #tpu.memory_space<vmem>>, %arg2: memref<256x128xf32, #tpu.memory_space<vmem>>, %arg3: memref<1x128xf32, #tpu.memory_space<vmem>>, %arg4: memref<128x128xf32, #tpu.memory_space<vmem>>, %arg5: memref<1x128xf32, #tpu.memory_space<vmem>>, %arg6: memref<8x128xf32, #tpu.memory_space<vmem>>) attributes {dimension_semantics = [#tpu.dimension_semantics<parallel>], iteration_bounds = array<i64: 1>, scalar_prefetch = 0 : i64, scratch_operands = 0 : i64, tpu.core_type = #tpu.core_type<tc>, window_params = [{transform_indices = @transform_0, window_bounds = array<i64: 8, 256>}, {pipeline_mode = #tpu.pipeline_mode<synchronous>, transform_indices = @transform_1, window_bounds = array<i64: 256, 128>}, {pipeline_mode = #tpu.pipeline_mode<synchronous>, transform_indices = @transform_2, window_bounds = array<i64: 1, 128>}, {pipeline_mode = #tpu.pipeline_mode<synchronous>, transform_indices = @transform_3, window_bounds = array<i64: 128, 128>}, {pipeline_mode = #tpu.pipeline_mode<synchronous>, transform_indices = @transform_4, window_bounds = array<i64: 1, 128>}, {transform_indices = @transform_5, window_bounds = array<i64: 8, 128>}]} {
    %c0 = arith.constant 0 : index
    %c0_0 = arith.constant 0 : index
    %0 = vector.load %arg1[%c0, %c0_0] : memref<8x256xf32, #tpu.memory_space<vmem>>, vector<8x256xf32>
    %c0_1 = arith.constant 0 : index
    %c0_2 = arith.constant 0 : index
    %1 = vector.load %arg2[%c0_1, %c0_2] : memref<256x128xf32, #tpu.memory_space<vmem>>, vector<256x128xf32>
    %cst = arith.constant dense<0.000000e+00> : vector<8x128xf32>
    %2 = tpu.matmul %0, %1, %cst {dimension_numbers = #tpu.dot_dimension_numbers<[1], [0], [0], [1], [0, 0, 1, 1], [], []>} : vector<8x256xf32>, vector<256x128xf32>, vector<8x128xf32> -> vector<8x128xf32>
    %c0_3 = arith.constant 0 : index
    %c0_4 = arith.constant 0 : index
    %3 = vector.load %arg3[%c0_3, %c0_4] : memref<1x128xf32, #tpu.memory_space<vmem>>, vector<1x128xf32>
    %4 = vector.broadcast %3 : vector<1x128xf32> to vector<8x128xf32>
    %5 = arith.addf %2, %4 : vector<8x128xf32>
    %cst_5 = arith.constant 5.000000e-01 : f32
    %6 = vector.broadcast %cst_5 : f32 to vector<8x128xf32>
    %7 = arith.mulf %6, %5 : vector<8x128xf32>
    %8 = math.tanh %7 : vector<8x128xf32>
    %cst_6 = arith.constant 1.000000e+00 : f32
    %9 = vector.broadcast %cst_6 : f32 to vector<8x128xf32>
    %10 = arith.addf %8, %9 : vector<8x128xf32>
    %cst_7 = arith.constant 5.000000e-01 : f32
    %11 = vector.broadcast %cst_7 : f32 to vector<8x128xf32>
    %12 = arith.mulf %11, %10 : vector<8x128xf32>
    %c0_8 = arith.constant 0 : index
    %c0_9 = arith.constant 0 : index
    %13 = vector.load %arg4[%c0_8, %c0_9] : memref<128x128xf32, #tpu.memory_space<vmem>>, vector<128x128xf32>
    %cst_10 = arith.constant dense<0.000000e+00> : vector<8x128xf32>
    %14 = tpu.matmul %12, %13, %cst_10 {dimension_numbers = #tpu.dot_dimension_numbers<[1], [0], [0], [1], [0, 0, 1, 1], [], []>} : vector<8x128xf32>, vector<128x128xf32>, vector<8x128xf32> -> vector<8x128xf32>
    %c0_11 = arith.constant 0 : index
    %c0_12 = arith.constant 0 : index
    %15 = vector.load %arg5[%c0_11, %c0_12] : memref<1x128xf32, #tpu.memory_space<vmem>>, vector<1x128xf32>
    %16 = vector.broadcast %15 : vector<1x128xf32> to vector<8x128xf32>
    %17 = arith.addf %14, %16 : vector<8x128xf32>
    %c0_13 = arith.constant 0 : index
    %c0_14 = arith.constant 0 : index
    %18 = vector.load %arg6[%c0_13, %c0_14] : memref<8x128xf32, #tpu.memory_space<vmem>>, vector<8x128xf32>
    tpu.vector_store %arg6[%c0_13, %c0_14], %17 {strides = array<i32>} : memref<8x128xf32, #tpu.memory_space<vmem>>, vector<8x128xf32>,
    return
  }
  func.func @transform_0(%arg0: i32) -> (i32, i32) {
    %c0_i32 = arith.constant 0 : i32
    %c0_i32_0 = arith.constant 0 : i32
    return %arg0, %c0_i32 : i32, i32
  }
  func.func @transform_1(%arg0: i32) -> (i32, i32) {
    %c0_i32 = arith.constant 0 : i32
    %c0_i32_0 = arith.constant 0 : i32
    %c0_i32_1 = arith.constant 0 : i32
    return %c0_i32, %c0_i32_0 : i32, i32
  }
  func.func @transform_2(%arg0: i32) -> (i32, i32) {
    %c0_i32 = arith.constant 0 : i32
    %c0_i32_0 = arith.constant 0 : i32
    %c0_i32_1 = arith.constant 0 : i32
    return %c0_i32, %c0_i32_0 : i32, i32
  }
  func.func @transform_3(%arg0: i32) -> (i32, i32) {
    %c0_i32 = arith.constant 0 : i32
    %c0_i32_0 = arith.constant 0 : i32
    %c0_i32_1 = arith.constant 0 : i32
    return %c0_i32, %c0_i32_0 : i32, i32
  }
  func.func @transform_4(%arg0: i32) -> (i32, i32) {
    %c0_i32 = arith.constant 0 : i32
    %c0_i32_0 = arith.constant 0 : i32
    %c0_i32_1 = arith.constant 0 : i32
    return %c0_i32, %c0_i32_0 : i32, i32
  }
  func.func @transform_5(%arg0: i32) -> (i32, i32) {
    %c0_i32 = arith.constant 0 : i32
    %c0_i32_0 = arith.constant 0 : i32
    return %arg0, %c0_i32 : i32, i32
  }
}

</mosaic_0001>

<llo_original>
// kernel: tpu_custom_call.1
$region0: #{tpu_custom_call.1}
  #allocation0 [shape = 'u32[]', space=smem, size = 0x4, offset = 0x4, fixed_abs, tag = 'smem constant byte address 0x4 - core index']
  #allocation1 [shape = 'u32[72,128]{1,0:T(1,128)}', space=vmem, size = 0x9000, scoped, tag = 'internal scratch']
  %s0 = inlined_call_operand.hbm [shape: f32[8,256], index: 0, kind: input, shape index: {}]
  %s1 = inlined_call_operand.hbm [shape: f32[256,128], index: 1, kind: input, shape index: {}]
  %s2 = inlined_call_operand.vmem [shape: f32[1,128], index: 2, kind: input, shape index: {}]
  %s3 = inlined_call_operand.hbm [shape: f32[128,128], index: 3, kind: input, shape index: {}]
  %s4 = inlined_call_operand.vmem [shape: f32[1,128], index: 4, kind: input, shape index: {}]
  %s5 = inlined_call_operand.hbm [shape: f32[8,128], index: 5, kind: output, shape index: {}]
  %s6 = sld [smem:[#allocation0]]
  $region42: #{tpu_custom_call.1} parent=0
    _
  %s8 = ssub.s32 1, %s6
  %s9 = scalar_select 0, %s8, %s6
  $region1: #{tpu_custom_call.1} parent=0
    #allocation2 [shape = 'u8[8192]{0}', space=vmem, size = 0x2000, scoped, tag = 'input window, operand 0, single buffered']
    #allocation3 [shape = 's32[1]{0}', space=sflag, size = 0x4, scoped, tag = 'scoped memory for tpu_custom_call.1']
    #allocation4 [shape = 's32[1]{0}', space=sflag, size = 0x4, scoped, tag = 'scoped memory for tpu_custom_call.1']
    #allocation5 [shape = 'u8[131072]{0}', space=vmem, size = 0x20000, scoped, tag = 'input window, operand 1, single buffered']
    #allocation6 [shape = 's32[1]{0}', space=sflag, size = 0x4, scoped, tag = 'scoped memory for tpu_custom_call.1']
    #allocation7 [shape = 'u8[65536]{0}', space=vmem, size = 0x10000, scoped, tag = 'input window, operand 3, single buffered']
    #allocation8 [shape = 'u8[4096]{0}', space=vmem, size = 0x1000, scoped, tag = 'output window, operand 0, single buffered']
    %10 = vsyncpa [#allocation3], 0
    %11 = vsyncpa [#allocation6], 0
    %12 = vsyncpa [#allocation4], 0
    // Predicated region
    $region2: #{tpu_custom_call.1} parent=1 // pred_check
      _
    $region3: #{tpu_custom_call.1} parent=1 // pred_check_branch
      %14 = sbr.rel (0) target = $region5
    $region4: #{tpu_custom_call.1} parent=1 // pred_region
      %16 = vsyncadd [#allocation3], 0
      %s18 = sshll.u32 %s0, 4
      %s19 = int_to_ptr.hbm [resolvable:$true] %s18
      %s20 = sshll.u32 [#allocation2], 4
      %s21 = int_to_ptr.vmem [resolvable:$true] %s20
      %23 = dma.hbm_to_vmem [thread:$0]  %s19, 256, %s21, [#allocation3]
    $region5: #{tpu_custom_call.1} parent=1 // pred_fallthru
      _
    // Predicated region
    $region6: #{tpu_custom_call.1} parent=1 // pred_check
      _
    $region7: #{tpu_custom_call.1} parent=1 // pred_check_branch
      %25 = sbr.rel (0) target = $region9
    $region8: #{tpu_custom_call.1} parent=1 // pred_region
      %27 = vsyncadd [#allocation6], 0
      %s28 = sshll.u32 %s1, 4
      %s29 = int_to_ptr.hbm [resolvable:$true] %s28
      %s30 = sshll.u32 [#allocation5], 4
      %s31 = int_to_ptr.vmem [resolvable:$true] %s30
      %36 = dma.hbm_to_vmem [thread:$0]  %s29, 4096, %s31, [#allocation6], 128, 128, 8
    $region9: #{tpu_custom_call.1} parent=1 // pred_fallthru
      _
    // Predicated region
    $region10: #{tpu_custom_call.1} parent=1 // pred_check
      _
    $region11: #{tpu_custom_call.1} parent=1 // pred_check_branch
      %38 = sbr.rel (0) target = $region13
    $region12: #{tpu_custom_call.1} parent=1 // pred_region
      _
    $region13: #{tpu_custom_call.1} parent=1 // pred_fallthru
      _
    // Predicated region
    $region14: #{tpu_custom_call.1} parent=1 // pred_check
      _
    $region15: #{tpu_custom_call.1} parent=1 // pred_check_branch
      %40 = sbr.rel (0) target = $region17
    $region16: #{tpu_custom_call.1} parent=1 // pred_region
      %42 = vsyncadd [#allocation6], 0
      %s43 = sshll.u32 %s3, 4
      %s44 = int_to_ptr.hbm [resolvable:$true] %s43
      %s45 = sshll.u32 [#allocation7], 4
      %s46 = int_to_ptr.vmem [resolvable:$true] %s45
      %51 = dma.hbm_to_vmem [thread:$0]  %s44, 2048, %s46, [#allocation6], 128, 128, 8
    $region17: #{tpu_custom_call.1} parent=1 // pred_fallthru
      _
    // Predicated region
    $region18: #{tpu_custom_call.1} parent=1 // pred_check
      _
    $region19: #{tpu_custom_call.1} parent=1 // pred_check_branch
      %53 = sbr.rel (0) target = $region21
    $region20: #{tpu_custom_call.1} parent=1 // pred_region
      _
    $region21: #{tpu_custom_call.1} parent=1 // pred_fallthru
      _
    // Predicated region
    $region22: #{tpu_custom_call.1} parent=1 // pred_check
      _
    $region23: #{tpu_custom_call.1} parent=1 // pred_check_branch
      %55 = sbr.rel (0) target = $region25
    $region24: #{tpu_custom_call.1} parent=1 // pred_region
      %57 = dma.done [#allocation3], 256
    $region25: #{tpu_custom_call.1} parent=1 // pred_fallthru
      _
    // Predicated region
    $region26: #{tpu_custom_call.1} parent=1 // pred_check
      _
    $region27: #{tpu_custom_call.1} parent=1 // pred_check_branch
      %59 = sbr.rel (0) target = $region29
    $region28: #{tpu_custom_call.1} parent=1 // pred_region
      %61 = dma.done [#allocation6], 4096
    $region29: #{tpu_custom_call.1} parent=1 // pred_fallthru
      _
    // Predicated region
    $region30: #{tpu_custom_call.1} parent=1 // pred_check
      _
    $region31: #{tpu_custom_call.1} parent=1 // pred_check_branch
      %63 = sbr.rel (0) target = $region33
    $region32: #{tpu_custom_call.1} parent=1 // pred_region
      %65 = dma.done [#allocation6], 2048
    $region33: #{tpu_custom_call.1} parent=1 // pred_fallthru
      _
    %v66 = vld [vmem:[#allocation2] sm:$0xff]
    %v67 = vld [vmem:[#allocation2 + $0x8] sm:$0xff]
    %v68 = vld [vmem:[#allocation5] sm:$0xff]
    %v69 = vld [vmem:[#allocation5 + $0x8] sm:$0xff]
    %v70 = vld [vmem:[#allocation5 + $0x10] sm:$0xff]
    %v71 = vld [vmem:[#allocation5 + $0x18] sm:$0xff]
    %v72 = vld [vmem:[#allocation5 + $0x20] sm:$0xff]
    %v73 = vld [vmem:[#allocation5 + $0x28] sm:$0xff]
    %v74 = vld [vmem:[#allocation5 + $0x30] sm:$0xff]
    %v75 = vld [vmem:[#allocation5 + $0x38] sm:$0xff]
    %v76 = vld [vmem:[#allocation5 + $0x40] sm:$0xff]
    %v77 = vld [vmem:[#allocation5 + $0x48] sm:$0xff]
    %v78 = vld [vmem:[#allocation5 + $0x50] sm:$0xff]
    %v79 = vld [vmem:[#allocation5 + $0x58] sm:$0xff]
    %v80 = vld [vmem:[#allocation5 + $0x60] sm:$0xff]
    %v81 = vld [vmem:[#allocation5 + $0x68] sm:$0xff]
    %v82 = vld [vmem:[#allocation5 + $0x70] sm:$0xff]
    %v83 = vld [vmem:[#allocation5 + $0x78] sm:$0xff]
    %v84 = vld [vmem:[#allocation5 + $0x80] sm:$0xff]
    %v85 = vld [vmem:[#allocation5 + $0x88] sm:$0xff]
    %v86 = vld [vmem:[#allocation5 + $0x90] sm:$0xff]
    %v87 = vld [vmem:[#allocation5 + $0x98] sm:$0xff]
    %v88 = vld [vmem:[#allocation5 + $0xa0] sm:$0xff]
    %v89 = vld [vmem:[#allocation5 + $0xa8] sm:$0xff]
    %v90 = vld [vmem:[#allocation5 + $0xb0] sm:$0xff]
    %v91 = vld [vmem:[#allocation5 + $0xb8] sm:$0xff]
    %v92 = vld [vmem:[#allocation5 + $0xc0] sm:$0xff]
    %v93 = vld [vmem:[#allocation5 + $0xc8] sm:$0xff]
    %v94 = vld [vmem:[#allocation5 + $0xd0] sm:$0xff]
    %v95 = vld [vmem:[#allocation5 + $0xd8] sm:$0xff]
    %v96 = vld [vmem:[#allocation5 + $0xe0] sm:$0xff]
    %v97 = vld [vmem:[#allocation5 + $0xe8] sm:$0xff]
    %v98 = vld [vmem:[#allocation5 + $0xf0] sm:$0xff]
    %v99 = vld [vmem:[#allocation5 + $0xf8] sm:$0xff]
    %v100 = vld [vmem:[%s2] sm:$0x1]
    %v102 = vperm.slane %v100, 0
    %104 = vmatpush.msra.mxu0 %v83
    %105 = vmatpush.msra.mxu0 %v82
    %106 = vmatpush.msra.mxu0 %v81
    %107 = vmatpush.msra.mxu0 %v80
    %108 = vmatpush.msra.mxu0 %v79
    %109 = vmatpush.msra.mxu0 %v78
    %110 = vmatpush.msra.mxu0 %v77
    %111 = vmatpush.msra.mxu0 %v76
    %112 = vmatpush.msra.mxu0 %v75
    %113 = vmatpush.msra.mxu0 %v74
    %114 = vmatpush.msra.mxu0 %v73
    %115 = vmatpush.msra.mxu0 %v72
    %116 = vmatpush.msra.mxu0 %v71
    %117 = vmatpush.msra.mxu0 %v70
    %118 = vmatpush.msra.mxu0 %v69
    %119 = vmatpush.msra.mxu0 %v68
    %120 = vmatmul.f32.gmra.mxu0 %v66
    %v121 = vpop.f32.mrf.mxu0
    %v122 = vadd.f32 %v102, %v121
    %123 = vdwg.mxu0
    %124 = vmatpush.msra.mxu0 %v99
    %125 = vmatpush.msra.mxu0 %v98
    %126 = vmatpush.msra.mxu0 %v97
    %127 = vmatpush.msra.mxu0 %v96
    %128 = vmatpush.msra.mxu0 %v95
    %129 = vmatpush.msra.mxu0 %v94
    %130 = vmatpush.msra.mxu0 %v93
    %131 = vmatpush.msra.mxu0 %v92
    %132 = vmatpush.msra.mxu0 %v91
    %133 = vmatpush.msra.mxu0 %v90
    %134 = vmatpush.msra.mxu0 %v89
    %135 = vmatpush.msra.mxu0 %v88
    %136 = vmatpush.msra.mxu0 %v87
    %137 = vmatpush.msra.mxu0 %v86
    %138 = vmatpush.msra.mxu0 %v85
    %139 = vmatpush.msra.mxu0 %v84
    %140 = vmatmul.f32.gmra.mxu0 %v67
    %v141 = vpop.f32.mrf.mxu0
    %v142 = vadd.f32 %v122, %v141
    %143 = vdwg.mxu0
    %v144 = vmul.f32 %v142, 0.5
    %v145 = vtanh.pop %v144
    %v146 = vadd.f32 %v145, 1.0
    %v147 = vmul.f32 %v146, 0.5
    %v148 = vld [vmem:[#allocation7] sm:$0xff]
    %v149 = vld [vmem:[#allocation7 + $0x8] sm:$0xff]
    %v150 = vld [vmem:[#allocation7 + $0x10] sm:$0xff]
    %v151 = vld [vmem:[#allocation7 + $0x18] sm:$0xff]
    %v152 = vld [vmem:[#allocation7 + $0x20] sm:$0xff]
    %v153 = vld [vmem:[#allocation7 + $0x28] sm:$0xff]
    %v154 = vld [vmem:[#allocation7 + $0x30] sm:$0xff]
    %v155 = vld [vmem:[#allocation7 + $0x38] sm:$0xff]
    %v156 = vld [vmem:[#allocation7 + $0x40] sm:$0xff]
    %v157 = vld [vmem:[#allocation7 + $0x48] sm:$0xff]
    %v158 = vld [vmem:[#allocation7 + $0x50] sm:$0xff]
    %v159 = vld [vmem:[#allocation7 + $0x58] sm:$0xff]
    %v160 = vld [vmem:[#allocation7 + $0x60] sm:$0xff]
    %v161 = vld [vmem:[#allocation7 + $0x68] sm:$0xff]
    %v162 = vld [vmem:[#allocation7 + $0x70] sm:$0xff]
    %v163 = vld [vmem:[#allocation7 + $0x78] sm:$0xff]
    %v164 = vld [vmem:[%s4] sm:$0x1]
    %v166 = vperm.slane %v164, 0
    %168 = vmatpush.msra.mxu0 %v163
    %169 = vmatpush.msra.mxu0 %v162
    %170 = vmatpush.msra.mxu0 %v161
    %171 = vmatpush.msra.mxu0 %v160
    %172 = vmatpush.msra.mxu0 %v159
    %173 = vmatpush.msra.mxu0 %v158
    %174 = vmatpush.msra.mxu0 %v157
    %175 = vmatpush.msra.mxu0 %v156
    %176 = vmatpush.msra.mxu0 %v155
    %177 = vmatpush.msra.mxu0 %v154
    %178 = vmatpush.msra.mxu0 %v153
    %179 = vmatpush.msra.mxu0 %v152
    %180 = vmatpush.msra.mxu0 %v151
    %181 = vmatpush.msra.mxu0 %v150
    %182 = vmatpush.msra.mxu0 %v149
    %183 = vmatpush.msra.mxu0 %v148
    %184 = vmatmul.f32.gmra.mxu0 %v147
    %v185 = vpop.f32.mrf.mxu0
    %v186 = vadd.f32 %v166, %v185
    %187 = vdwg.mxu0
    %188 = vst [vmem:[#allocation8] sm:$0xff] %v186
    // Predicated region
    $region34: #{tpu_custom_call.1} parent=1 // pred_check
      _
    $region35: #{tpu_custom_call.1} parent=1 // pred_check_branch
      %190 = sbr.rel (0) target = $region37
    $region36: #{tpu_custom_call.1} parent=1 // pred_region
      %192 = vsyncadd [#allocation4], 0
      %s194 = sshll.u32 [#allocation8], 4
      %s195 = int_to_ptr.vmem [resolvable:$true] %s194
      %s196 = sshll.u32 %s5, 4
      %s197 = int_to_ptr.hbm [resolvable:$true] %s196
      %199 = dma.vmem_to_hbm [thread:$0]  %s195, 128, %s197, [#allocation4]
    $region37: #{tpu_custom_call.1} parent=1 // pred_fallthru
      _
    // Predicated region
    $region38: #{tpu_custom_call.1} parent=1 // pred_check
      _
    $region39: #{tpu_custom_call.1} parent=1 // pred_check_branch
      %201 = sbr.rel (0) target = $region41
    $region40: #{tpu_custom_call.1} parent=1 // pred_region
      %203 = dma.done [#allocation4], 128
    $region41: #{tpu_custom_call.1} parent=1 // pred_fallthru
      _
    %204 = vsyncpa [#allocation3], 1
    %205 = vsyncpa [#allocation6], 1
    %206 = vsyncpa [#allocation4], 1

</llo_original>
